<compile_context>
chip_gen: v5e
topology: v5e:2x2
jax: 0.10.0
libtpu: 0.0.40
codegen_flags: <defaults>
</compile_context>

<pallas_src>
import jax
import jax.numpy as jnp
from jax.experimental import pallas as pl
from jax.experimental.pallas import tpu as pltpu

NUM_SUB = 8                      # substrate nodes (num_sub)
SUB_FEAT = 4                     # GCNNBlock in_features
VNR_FEAT = 2                     # vnr_conn in_features
HID = 8                          # ChebConv / vnr_conn output width
FLAT = 2 * HID * NUM_SUB         # policy / value_head in_features (= 128)
LANES = 128                      # lane width of everything in the kernel

IN_LANES = 128                   # padded per-step input width (contraction dim of matmul #1)
ONE_LANE = NUM_SUB * SUB_FEAT + VNR_FEAT   # lane 34 = constant 1.0 (drives the bias row of Kmat)
HEAD_ROW0 = 128                  # slab row offset of the (128,128) permuted head weights
BHEAD_ROW = 256                  # slab row of the head bias
SLAB_ROWS = 264                  # (264,128) f32 param slab = ~132 KiB

TB = 8                           # batch rows per grid step (sublane tile)
NEG_BIG = -1e30


# ------------------------------ fused kernel ------------------------------- #

def actor_critic_kernel(inp_ref, slab_ref, out_ref):
    """Two MXU matmuls + VPU/EUP elementwise: folded ChebConv/vnr operator,
    lane-masked relu/tanh, permuted policy|value head, softmax."""
    kmat = slab_ref[0:IN_LANES, :]                       # (128,128) folded graph operator (+bias row)
    w_head = slab_ref[HEAD_ROW0:HEAD_ROW0 + LANES, :]    # (128,128) perm-folded policy|value head
    b_head = slab_ref[BHEAD_ROW:BHEAD_ROW + 1, :]        # (1,128)

    # Pre-activations for all N substrate nodes (lanes 0:64, node-major n*8+h)
    # and the selected virtual node (lanes 64:72); lanes 72:128 stay 0.
    z = jnp.dot(inp_ref[...], kmat, preferred_element_type=jnp.float32)   # (TB,128)

    lane = jax.lax.broadcasted_iota(jnp.int32, z.shape, 1)
    # relu only on the substrate lanes, then tanh on everything (matches
    # tanh(flatten(cat(virt_rep, relu(cheb)))) up to the folded permutation).
    act = jnp.tanh(jnp.where(lane < NUM_SUB * HID, jnp.maximum(z, 0.0), z))

    # Single head matmul: policy logits in lanes 0:8, value in lane 8, rest 0.
    logits = jnp.dot(act, w_head, preferred_element_type=jnp.float32) + b_head

    masked = jnp.where(lane < NUM_SUB, logits, NEG_BIG)
    m = jnp.max(masked, axis=-1, keepdims=True)
    e = jnp.exp(masked - m)                              # exactly 0 outside logit lanes
    probs = e / jnp.sum(e, axis=-1, keepdims=True)       # exact normalization
    out_ref[...] = probs + jnp.where(lane == NUM_SUB, logits, 0.0)


# ------------------------------- wrappers ----------------------------------- #

@jax.jit
def actor_critic_forward(slab, subs_x_batch, vnr_rows):
    """Batched forward: B independent (state, selected-vnr-node) steps."""
    b = subs_x_batch.shape[0]
    assert b % TB == 0, "batch must be a multiple of the sublane tile"

    # Pack per-step inputs into lane-padded rows (layout plumbing, done in XLA).
    inp = jnp.zeros((b, IN_LANES), jnp.float32)
    inp = inp.at[:, :NUM_SUB * SUB_FEAT].set(subs_x_batch.reshape(b, -1))
    inp = inp.at[:, NUM_SUB * SUB_FEAT:ONE_LANE].set(vnr_rows)
    inp = inp.at[:, ONE_LANE].set(1.0)                   # constant-1 lane -> folded biases

    out = pl.pallas_call(
        actor_critic_kernel,
        out_shape=jax.ShapeDtypeStruct((b, LANES), jnp.float32),
        grid_spec=pltpu.PrefetchScalarGridSpec(
            num_scalar_prefetch=0,
            grid=(b // TB,),
            in_specs=[pl.BlockSpec((TB, IN_LANES), lambda i: (i, 0)),
                      pl.BlockSpec((SLAB_ROWS, LANES), lambda i: (0, 0))],
            out_specs=pl.BlockSpec((TB, LANES), lambda i: (i, 0)),
        ),
        compiler_params=pltpu.CompilerParams(
            dimension_semantics=("parallel",)),           # megacore sharding on v7x
    )(inp, slab)
    return out[:, :NUM_SUB], out[:, NUM_SUB]              # probs (B,N), value (B,)


def scaled_laplacian(edge_index, num_nodes):
    """Dense L_hat = -D^{-1/2} A D^{-1/2} (PyG ChebConv 'sym', lambda_max=2).
    Static per episode; hoisted out of the per-step path."""
    src, dst = edge_index[0], edge_index[1]
    a = jnp.zeros((num_nodes, num_nodes), jnp.float32).at[src, dst].set(1.0)
    deg = a.sum(axis=1)
    dinv = jnp.where(deg > 0, 1.0 / jnp.sqrt(jnp.maximum(deg, 1e-12)), 0.0)
    return -(dinv[:, None] * a * dinv[None, :])


def prepare_params(raw, lhat, perm):
    """One-time folding of the graph operator, the Chebyshev recurrence, the
    vnr repeat, the flatten layout and the random permutation into a single
    lane-padded parameter slab."""
    n, f, h = NUM_SUB, SUB_FEAT, HID
    eye = jnp.eye(n, dtype=jnp.float32)
    t1_op = lhat
    t2_op = 2.0 * (lhat @ lhat) - eye

    # Kmat_subs[(m*4+f), (n*8+h)] = I[n,m] W0[f,h] + T1[n,m] W1[f,h] + T2[n,m] W2[f,h]
    k_subs = (jnp.einsum('nm,fh->mfnh', eye, raw['w_cheb0'])
              + jnp.einsum('nm,fh->mfnh', t1_op, raw['w_cheb1'])
              + jnp.einsum('nm,fh->mfnh', t2_op, raw['w_cheb2'])
              ).reshape(n * f, n * h)                                  # (32, 64)

    kmat = jnp.zeros((IN_LANES, LANES), jnp.float32)
    kmat = kmat.at[:n * f, :n * h].set(k_subs)
    kmat = kmat.at[n * f:n * f + VNR_FEAT, n * h:n * h + h].set(raw['w_vnr'])
    bias_row = jnp.zeros((LANES,), jnp.float32)
    bias_row = bias_row.at[:n * h].set(jnp.tile(raw['b_cheb'][0], n))  # b_cheb per node
    bias_row = bias_row.at[n * h:n * h + h].set(raw['b_vnr'][0])
    kmat = kmat.at[ONE_LANE, :].set(bias_row)                          # driven by constant-1 lane

    # Head: fold randperm (W'[j] = W[argsort(perm)[j]]), the flatten layout and the
    # N-fold virtual-node repeat into the row order / row sums of the head weights.
    w_full = jnp.zeros((FLAT, LANES), jnp.float32)
    w_full = w_full.at[:, :NUM_SUB].set(raw['w_pol'])
    w_full = w_full.at[:, NUM_SUB:NUM_SUB + 1].set(raw['w_val'])
    inv_perm = jnp.argsort(perm)
    w_perm = w_full[inv_perm]                                          # rows in flatten order
    w_head = jnp.zeros((LANES, LANES), jnp.float32)
    w_head = w_head.at[:n * h].set(w_perm[n * h:])                     # substrate rows
    w_head = w_head.at[n * h:n * h + h].set(
        w_perm[:n * h].reshape(n, h, LANES).sum(axis=0))               # summed virt-repeat rows

    b_head = jnp.zeros((1, LANES), jnp.float32)
    b_head = b_head.at[:, :NUM_SUB].set(raw['b_pol'])
    b_head = b_head.at[:, NUM_SUB:NUM_SUB + 1].set(raw['b_val'])

    slab = jnp.zeros((SLAB_ROWS, LANES), jnp.float32)
    slab = slab.at[0:IN_LANES].set(kmat)
    slab = slab.at[HEAD_ROW0:HEAD_ROW0 + LANES].set(w_head)
    slab = slab.at[BHEAD_ROW:BHEAD_ROW + 1].set(b_head)
    return slab


def reference_forward(raw, lhat, subs_x, vnr_row, perm):
    """Pure-JAX reference of the original PyTorch forward (j == 0 path)."""
    t0 = subs_x
    t1 = lhat @ t0
    t2 = 2.0 * (lhat @ t1) - t0
    z = t0 @ raw['w_cheb0'] + t1 @ raw['w_cheb1'] + t2 @ raw['w_cheb2'] + raw['b_cheb']
    subs = jnp.maximum(z, 0.0)
    vnode = vnr_row @ raw['w_vnr'] + raw['b_vnr'][0]
    fc = jnp.concatenate([jnp.tile(vnode[None, :], (NUM_SUB, 1)), subs],
                         axis=0).reshape(-1)
    fc = jnp.tanh(fc[perm])
    probs = jax.nn.softmax(fc @ raw['w_pol'] + raw['b_pol'][0])
    value = fc @ raw['w_val'] + raw['b_val'][0]
    return probs, value[0]


# --------------------------------- demo ------------------------------------- #

if __name__ == "__main__":
    key = jax.random.PRNGKey(0)
    ks = jax.random.split(key, 12)

    # Deterministic synthetic parameters (shapes from the module __init__).
    raw = {
        # ChebConv(4, 8, K=3): weights ~ U(0, 0.5) as in init_weights(), bias zeros
        "w_cheb0": jax.random.uniform(ks[0], (SUB_FEAT, HID), jnp.float32, 0.0, 0.5),
        "w_cheb1": jax.random.uniform(ks[1], (SUB_FEAT, HID), jnp.float32, 0.0, 0.5),
        "w_cheb2": jax.random.uniform(ks[2], (SUB_FEAT, HID), jnp.float32, 0.0, 0.5),
        "b_cheb":  jnp.zeros((1, HID), jnp.float32),
        # vnr_conn = Linear(2, 8)
        "w_vnr": jax.random.uniform(ks[3], (VNR_FEAT, HID), jnp.float32, -0.5, 0.5),
        "b_vnr": jax.random.uniform(ks[4], (1, HID), jnp.float32, -0.5, 0.5),
        # policy = Linear(2*8*num_sub, num_sub)   (stored as (in, out))
        "w_pol": jax.random.uniform(ks[5], (FLAT, NUM_SUB), jnp.float32, -0.1, 0.1),
        "b_pol": jax.random.uniform(ks[6], (1, NUM_SUB), jnp.float32, -0.1, 0.1),
        # value_head = Linear(2*8*num_sub, 1)
        "w_val": jax.random.uniform(ks[7], (FLAT, 1), jnp.float32, -0.1, 0.1),
        "b_val": jax.random.uniform(ks[8], (1, 1), jnp.float32, -0.1, 0.1),
    }

    # Substrate graph: undirected ring of NUM_SUB nodes (both edge directions, PyG style).
    src = jnp.arange(NUM_SUB, dtype=jnp.int32)
    dst = (src + 1) % NUM_SUB
    subs_edge_index = jnp.stack([jnp.concatenate([src, dst]),
                                 jnp.concatenate([dst, src])], axis=0)

    # Batch of B independent steps (different substrate features / selected vnr node).
    B = 16
    subs_x_batch = jax.random.uniform(ks[9], (B, NUM_SUB, SUB_FEAT), jnp.float32)
    vnr_rows = jax.random.uniform(ks[10], (B, VNR_FEAT), jnp.float32)

    # TODO(synk): torch.randperm is runtime-random per forward; a fixed jax.random
    # permutation stands in and is folded into the head weights at setup, so outputs
    # match PyTorch only if the same permutation is exported.
    perm = jax.random.permutation(ks[11], FLAT)

    # Hoisted one-time setup (static per episode).
    lhat = scaled_laplacian(subs_edge_index, NUM_SUB)
    slab = prepare_params(raw, lhat, perm)

    probs, value = actor_critic_forward(slab, subs_x_batch, vnr_rows)
    jax.block_until_ready((probs, value))

    # Pure-JAX reference check (per batch item).
    probs_ref, value_ref = jax.vmap(
        lambda sx, vr: reference_forward(raw, lhat, sx, vr, perm))(subs_x_batch, vnr_rows)

    assert probs.shape == (B, NUM_SUB), probs.shape
    assert value.shape == (B,), value.shape
    assert bool(jnp.all(jnp.abs(jnp.sum(probs, axis=-1) - 1.0) < 1e-3))
    assert bool(jnp.all(jnp.isfinite(probs))) and bool(jnp.all(jnp.isfinite(value)))
    assert bool(jnp.allclose(probs, probs_ref, rtol=1e-2, atol=2e-3)), (probs, probs_ref)
    assert bool(jnp.allclose(value, value_ref, rtol=1e-2, atol=2e-3)), (value, value_ref)
    print("KERNEL_OK")
</pallas_src>

<mosaic_0001>
module attributes {stable_mosaic.version = 11 : i64} {
  func.func @actor_critic_kernel(%arg0: i32, %arg1: memref<8x128xf32, #tpu.memory_space<vmem>>, %arg2: memref<264x128xf32, #tpu.memory_space<vmem>>, %arg3: memref<8x128xf32, #tpu.memory_space<vmem>>) attributes {dimension_semantics = [#tpu.dimension_semantics<parallel>], iteration_bounds = array<i64: 2>, scalar_prefetch = 0 : i64, scratch_operands = 0 : i64, tpu.core_type = #tpu.core_type<tc>, window_params = [{transform_indices = @transform_0, window_bounds = array<i64: 8, 128>}, {pipeline_mode = #tpu.pipeline_mode<synchronous>, transform_indices = @transform_1, window_bounds = array<i64: 264, 128>}, {transform_indices = @transform_2, window_bounds = array<i64: 8, 128>}]} {
    %c0 = arith.constant 0 : index
    %c0_0 = arith.constant 0 : index
    %0 = vector.load %arg2[%c0, %c0_0] : memref<264x128xf32, #tpu.memory_space<vmem>>, vector<128x128xf32>
    %c128 = arith.constant 128 : index
    %c0_1 = arith.constant 0 : index
    %1 = vector.load %arg2[%c128, %c0_1] : memref<264x128xf32, #tpu.memory_space<vmem>>, vector<128x128xf32>
    %c256 = arith.constant 256 : index
    %c0_2 = arith.constant 0 : index
    %2 = vector.load %arg2[%c256, %c0_2] : memref<264x128xf32, #tpu.memory_space<vmem>>, vector<1x128xf32>
    %c0_3 = arith.constant 0 : index
    %c0_4 = arith.constant 0 : index
    %3 = vector.load %arg1[%c0_3, %c0_4] : memref<8x128xf32, #tpu.memory_space<vmem>>, vector<8x128xf32>
    %cst = arith.constant dense<0.000000e+00> : vector<8x128xf32>
    %4 = tpu.matmul %3, %0, %cst {dimension_numbers = #tpu.dot_dimension_numbers<[1], [0], [0], [1], [0, 0, 1, 1], [], []>} : vector<8x128xf32>, vector<128x128xf32>, vector<8x128xf32> -> vector<8x128xf32>
    %5 = tpu.iota {dimensions = array<i32: 1>} : vector<8x128xi32>
    %c64_i32 = arith.constant 64 : i32
    %6 = vector.broadcast %c64_i32 : i32 to vector<8x128xi32>
    %7 = arith.cmpi slt, %5, %6 : vector<8x128xi32>
    %cst_5 = arith.constant 0.000000e+00 : f32
    %8 = vector.broadcast %cst_5 : f32 to vector<8x128xf32>
    %9 = arith.maximumf %4, %8 : vector<8x128xf32>
    %10 = arith.select %7, %9, %4 : vector<8x128xi1>, vector<8x128xf32>
    %11 = math.tanh %10 : vector<8x128xf32>
    %cst_6 = arith.constant dense<0.000000e+00> : vector<8x128xf32>
    %12 = tpu.matmul %11, %1, %cst_6 {dimension_numbers = #tpu.dot_dimension_numbers<[1], [0], [0], [1], [0, 0, 1, 1], [], []>} : vector<8x128xf32>, vector<128x128xf32>, vector<8x128xf32> -> vector<8x128xf32>
    %13 = vector.broadcast %2 : vector<1x128xf32> to vector<8x128xf32>
    %14 = arith.addf %12, %13 : vector<8x128xf32>
    %c8_i32 = arith.constant 8 : i32
    %15 = vector.broadcast %c8_i32 : i32 to vector<8x128xi32>
    %16 = arith.cmpi slt, %5, %15 : vector<8x128xi32>
    %cst_7 = arith.constant -1.000000e+30 : f32
    %17 = vector.broadcast %cst_7 : f32 to vector<8x128xf32>
    %18 = arith.select %16, %14, %17 : vector<8x128xi1>, vector<8x128xf32>
    %cst_8 = arith.constant dense<0xFF800000> : vector<8xf32>
    %19 = vector.multi_reduction <maximumf>, %18, %cst_8 [1] : vector<8x128xf32> to vector<8xf32>
    %20 = vector.shape_cast %19 : vector<8xf32> to vector<8x1xf32>
    %21 = vector.broadcast %20 : vector<8x1xf32> to vector<8x128xf32>
    %22 = arith.subf %18, %21 : vector<8x128xf32>
    %23 = math.exp %22 : vector<8x128xf32>
    %cst_9 = arith.constant dense<0.000000e+00> : vector<8xf32>
    %24 = vector.multi_reduction <add>, %23, %cst_9 [1] : vector<8x128xf32> to vector<8xf32>
    %25 = vector.shape_cast %24 : vector<8xf32> to vector<8x1xf32>
    %26 = vector.broadcast %25 : vector<8x1xf32> to vector<8x128xf32>
    %27 = arith.divf %23, %26 : vector<8x128xf32>
    %c8_i32_10 = arith.constant 8 : i32
    %28 = vector.broadcast %c8_i32_10 : i32 to vector<8x128xi32>
    %29 = arith.cmpi eq, %5, %28 : vector<8x128xi32>
    %cst_11 = arith.constant 0.000000e+00 : f32
    %30 = vector.broadcast %cst_11 : f32 to vector<8x128xf32>
    %31 = arith.select %29, %14, %30 : vector<8x128xi1>, vector<8x128xf32>
    %32 = arith.addf %27, %31 : vector<8x128xf32>
    %c0_12 = arith.constant 0 : index
    %c0_13 = arith.constant 0 : index
    %33 = vector.load %arg3[%c0_12, %c0_13] : memref<8x128xf32, #tpu.memory_space<vmem>>, vector<8x128xf32>
    tpu.vector_store %arg3[%c0_12, %c0_13], %32 {strides = array<i32>} : memref<8x128xf32, #tpu.memory_space<vmem>>, vector<8x128xf32>,
    return
  }
  func.func @transform_0(%arg0: i32) -> (i32, i32) {
    %c0_i32 = arith.constant 0 : i32
    %c0_i32_0 = arith.constant 0 : i32
    return %arg0, %c0_i32 : i32, i32
  }
  func.func @transform_1(%arg0: i32) -> (i32, i32) {
    %c0_i32 = arith.constant 0 : i32
    %c0_i32_0 = arith.constant 0 : i32
    %c0_i32_1 = arith.constant 0 : i32
    return %c0_i32, %c0_i32_0 : i32, i32
  }
  func.func @transform_2(%arg0: i32) -> (i32, i32) {
    %c0_i32 = arith.constant 0 : i32
    %c0_i32_0 = arith.constant 0 : i32
    return %arg0, %c0_i32 : i32, i32
  }
}

</mosaic_0001>

<llo_original>
// kernel: actor_critic_forward.1
$region0: #{actor_critic_forward.1}
  #allocation0 [shape = 'u32[]', space=smem, size = 0x4, offset = 0x4, fixed_abs, tag = 'smem constant byte address 0x4 - core index']
  #allocation1 [shape = 'u32[72,128]{1,0:T(1,128)}', space=vmem, size = 0x9000, scoped, tag = 'internal scratch']
  %s0 = inlined_call_operand.vmem [shape: f32[16,128], index: 0, kind: input, shape index: {}]
  %s1 = inlined_call_operand.hbm [shape: f32[264,128], index: 1, kind: input, shape index: {}]
  %s2 = inlined_call_operand.vmem [shape: f32[16,128], index: 2, kind: output, shape index: {}]
  %s3 = sld [smem:[#allocation0]]
  $region45: #{actor_critic_forward.1} parent=0
    _
  %s5 = ssub.s32 1, %s3
  %s6 = scalar_select 0, %s5, %s3
  $region1: #{actor_critic_forward.1} parent=0
    #allocation2 [shape = 'u8[135168]{0}', space=vmem, size = 0x21000, scoped, tag = 'input window, operand 1, single buffered']
    #allocation3 [shape = 's32[2]{0}', space=sflag, size = 0x8, scoped, tag = 'scoped memory for actor_critic_forward.1']
    %7 = vsyncpa [#allocation3], 0
    loop: start=0, step=1, limit=4
    $region2: #{actor_critic_forward.1} parent=1 // loop_pre_header
      _
    $region3: #{actor_critic_forward.1} parent=1 // loop_header
      %s9 = sphi 0, %s13
      %p10 = scmp.ge.s32.totalorder %s9, 4
      %s19 = sphi 0, %s21
      %s22 = sphi 0, %s19
      %s23 = sphi 0, %s22
      %s39 = sphi 0, %s23
      %s43 = sphi 0, %s43
      %s45 = sphi 0, %s43
      %s46 = sphi 0, %s45
      %s60 = sphi 0, %s46
      %s66 = sphi 0, %s68
      %s69 = sphi 0, %s66
      %s70 = sphi 0, %s69
      %s86 = sphi 0, %s70
    $region4: #{actor_critic_forward.1} parent=1 // loop_header_branch
      %12 = sbr.rel (%p10) target = $region8
    $region5: #{actor_critic_forward.1} parent=1 // loop_body
      %s14 = ssub.s32 %s9, 1
      %s15 = ssub.s32 %s9, 2
      %s16 = sadd.s32 %s9, 1
      %s17 = ssub.s32 %s9, %s16
      %p18 = scmp.eq.s32.totalorder %s17, 0
      %s20 = sadd.s32 %s19, 1
      %s21 = scalar_select %p18, %s19, %s20
      %p24 = pneg %p18
      %p25 = scmp.eq.s32.totalorder %s9, 1
      %p26 = por %p24, %p25
      %p27 = scmp.ne.s32.totalorder %s19, %s22
      %p28 = scmp.eq.s32.totalorder %s9, 0
      %p29 = por %p27, %p28
      %p30 = scmp.ne.s32.totalorder %s19, %s22
      %p31 = scmp.eq.s32.totalorder %s14, 1
      %p32 = por %p30, %p31
      %p33 = scmp.ne.s32.totalorder %s22, %s23
      %p34 = scmp.eq.s32.totalorder %s14, 0
      %p35 = por %p33, %p34
      %p36 = scmp.ne.s32.totalorder %s22, %s23
      %p37 = scmp.eq.s32.totalorder %s15, 1
      %p38 = por %p36, %p37
      %p40 = scmp.ne.s32.totalorder %s23, %s39
      %p41 = scmp.eq.s32.totalorder %s15, 0
      %p42 = por %p40, %p41
      %s44 = sadd.s32 %s43, 1
      %p47 = scmp.eq.s32.totalorder %s9, 1
      %p48 = scmp.ne.s32.totalorder %s43, %s45
      %p49 = scmp.eq.s32.totalorder %s9, 0
      %p50 = por %p48, %p49
      %p51 = scmp.ne.s32.totalorder %s43, %s45
      %p52 = scmp.eq.s32.totalorder %s14, 1
      %p53 = por %p51, %p52
      %p54 = scmp.ne.s32.totalorder %s45, %s46
      %p55 = scmp.eq.s32.totalorder %s14, 0
      %p56 = por %p54, %p55
      %p57 = scmp.ne.s32.totalorder %s45, %s46
      %p58 = scmp.eq.s32.totalorder %s15, 1
      %p59 = por %p57, %p58
      %p61 = scmp.ne.s32.totalorder %s46, %s60
      %p62 = scmp.eq.s32.totalorder %s15, 0
      %p63 = por %p61, %p62
      %s64 = ssub.s32 %s9, %s16
      %p65 = scmp.eq.s32.totalorder %s64, 0
      %s67 = sadd.s32 %s66, 1
      %s68 = scalar_select %p65, %s66, %s67
      %p71 = pneg %p65
      %p72 = scmp.eq.s32.totalorder %s9, 1
      %p73 = por %p71, %p72
      %p74 = scmp.ne.s32.totalorder %s66, %s69
      %p75 = scmp.eq.s32.totalorder %s9, 0
      %p76 = por %p74, %p75
      %p77 = scmp.ne.s32.totalorder %s66, %s69
      %p78 = scmp.eq.s32.totalorder %s14, 1
      %p79 = por %p77, %p78
      %p80 = scmp.ne.s32.totalorder %s69, %s70
      %p81 = scmp.eq.s32.totalorder %s14, 0
      %p82 = por %p80, %p81
      %p83 = scmp.ne.s32.totalorder %s69, %s70
      %p84 = scmp.eq.s32.totalorder %s15, 1
      %p85 = por %p83, %p84
      %p87 = scmp.ne.s32.totalorder %s70, %s86
      %p88 = scmp.eq.s32.totalorder %s15, 0
      %p89 = por %p87, %p88
      %p90 = scmp.le.s32.totalorder 1, %s9
      %p91 = scmp.lt.s32.totalorder %s9, 3
      %p92 = pnand %p90, %p91
      %p93 = pneg %p92
      // Predicated region
      $region9: #{actor_critic_forward.1} parent=5 // pred_check
        _
      $region10: #{actor_critic_forward.1} parent=5 // pred_check_branch
        %95 = sbr.rel (%p92) target = $region12
      $region11: #{actor_critic_forward.1} parent=5 // pred_region
        %s96 = ssub.s32 %s9, 1
        // Predicated region
        $region13: #{actor_critic_forward.1} parent=11 // pred_check
          %p97 = pneg %p56
        $region14: #{actor_critic_forward.1} parent=11 // pred_check_branch
          %99 = sbr.rel (%p97) target = $region16
        $region15: #{actor_critic_forward.1} parent=11 // pred_region
          %101 = vsyncadd [#allocation3], 0
          %s102 = sshll.u32 %s1, 4
          %s103 = int_to_ptr.hbm [resolvable:$true] %s102
          %s104 = sshll.u32 [#allocation2], 4
          %s105 = int_to_ptr.vmem [resolvable:$true] %s104
          %110 = dma.hbm_to_vmem [thread:$0]  %s103, 4224, %s105, [#allocation3], 128, 128, 8
        $region16: #{actor_critic_forward.1} parent=11 // pred_fallthru
          _
      $region12: #{actor_critic_forward.1} parent=5 // pred_fallthru
        _
      %p111 = scmp.lt.s32.totalorder %s9, 2
      // Predicated region
      $region17: #{actor_critic_forward.1} parent=5 // pred_check
        %p112 = pneg %p111
      $region18: #{actor_critic_forward.1} parent=5 // pred_check_branch
        %114 = sbr.rel (%p112) target = $region20
      $region19: #{actor_critic_forward.1} parent=5 // pred_region
        // Predicated region
        $region21: #{actor_critic_forward.1} parent=19 // pred_check
          %p115 = pneg %p29
        $region22: #{actor_critic_forward.1} parent=19 // pred_check_branch
          %117 = sbr.rel (%p115) target = $region24
        $region23: #{actor_critic_forward.1} parent=19 // pred_region
          %p118 = scmp.lt.s32.totalorder %s9, 1
          %s119 = scalar_select %p118, %s9, 1
          %s120 = smul.addr %s119, 8
          %s121 = scalar_lea.vmem %s0, %s120
        $region24: #{actor_critic_forward.1} parent=19 // pred_fallthru
          _
      $region20: #{actor_critic_forward.1} parent=5 // pred_fallthru
        _
      %p122 = scmp.le.s32.totalorder 1, %s9
      %p123 = scmp.lt.s32.totalorder %s9, 3
      %p124 = pnand %p122, %p123
      %p125 = pneg %p124
      // Predicated region
      $region25: #{actor_critic_forward.1} parent=5 // pred_check
        _
      $region26: #{actor_critic_forward.1} parent=5 // pred_check_branch
        %127 = sbr.rel (%p124) target = $region28
      $region27: #{actor_critic_forward.1} parent=5 // pred_region
        %s128 = ssub.s32 %s9, 1
        // Predicated region
        $region29: #{actor_critic_forward.1} parent=27 // pred_check
          %p129 = pneg %p56
        $region30: #{actor_critic_forward.1} parent=27 // pred_check_branch
          %131 = sbr.rel (%p129) target = $region32
        $region31: #{actor_critic_forward.1} parent=27 // pred_region
          %133 = dma.done [#allocation3], 4224
        $region32: #{actor_critic_forward.1} parent=27 // pred_fallthru
          _
        %p134 = scmp.lt.s32.totalorder %s14, 1
        %s135 = scalar_select %p134, %s14, 1
        %s136 = smul.addr %s135, 8
        %s137 = scalar_lea.vmem %s0, %s136
        %p138 = pneg %p35
        %p139 = pneg %p32
        %p140 = pneg %p56
        %p141 = pneg %p53
        %p142 = pneg %p82
        %p143 = pneg %p79
        %p144 = scmp.lt.s32.totalorder %s14, 1
        %s145 = scalar_select %p144, %s14, 1
        %s146 = smul.addr %s145, 8
        %s147 = scalar_lea.vmem %s2, %s146
        %p148 = scmp.lt.s32.totalorder %s14, 1
        %s149 = scalar_select %p148, %s14, 1
        %s150 = smul.addr %s149, 8
        %s151 = scalar_lea.vmem %s0, %s150
        %p152 = scmp.lt.s32.totalorder %s14, 1
        %s153 = scalar_select %p152, %s14, 1
        %s154 = smul.addr %s153, 8
        %s155 = scalar_lea.vmem %s2, %s154
        %v156 = vld [vmem:[#allocation2] sm:$0xff]
        %v157 = vld [vmem:[#allocation2 + $0x8] sm:$0xff]
        %v158 = vld [vmem:[#allocation2 + $0x10] sm:$0xff]
        %v159 = vld [vmem:[#allocation2 + $0x18] sm:$0xff]
        %v160 = vld [vmem:[#allocation2 + $0x20] sm:$0xff]
        %v161 = vld [vmem:[#allocation2 + $0x28] sm:$0xff]
        %v162 = vld [vmem:[#allocation2 + $0x30] sm:$0xff]
        %v163 = vld [vmem:[#allocation2 + $0x38] sm:$0xff]
        %v164 = vld [vmem:[#allocation2 + $0x40] sm:$0xff]
        %v165 = vld [vmem:[#allocation2 + $0x48] sm:$0xff]
        %v166 = vld [vmem:[#allocation2 + $0x50] sm:$0xff]
        %v167 = vld [vmem:[#allocation2 + $0x58] sm:$0xff]
        %v168 = vld [vmem:[#allocation2 + $0x60] sm:$0xff]
        %v169 = vld [vmem:[#allocation2 + $0x68] sm:$0xff]
        %v170 = vld [vmem:[#allocation2 + $0x70] sm:$0xff]
        %v171 = vld [vmem:[#allocation2 + $0x78] sm:$0xff]
        %v172 = vld [vmem:[#allocation2 + $0x80] sm:$0xff]
        %v173 = vld [vmem:[#allocation2 + $0x88] sm:$0xff]
        %v174 = vld [vmem:[#allocation2 + $0x90] sm:$0xff]
        %v175 = vld [vmem:[#allocation2 + $0x98] sm:$0xff]
        %v176 = vld [vmem:[#allocation2 + $0xa0] sm:$0xff]
        %v177 = vld [vmem:[#allocation2 + $0xa8] sm:$0xff]
        %v178 = vld [vmem:[#allocation2 + $0xb0] sm:$0xff]
        %v179 = vld [vmem:[#allocation2 + $0xb8] sm:$0xff]
        %v180 = vld [vmem:[#allocation2 + $0xc0] sm:$0xff]
        %v181 = vld [vmem:[#allocation2 + $0xc8] sm:$0xff]
        %v182 = vld [vmem:[#allocation2 + $0xd0] sm:$0xff]
        %v183 = vld [vmem:[#allocation2 + $0xd8] sm:$0xff]
        %v184 = vld [vmem:[#allocation2 + $0xe0] sm:$0xff]
        %v185 = vld [vmem:[#allocation2 + $0xe8] sm:$0xff]
        %v186 = vld [vmem:[#allocation2 + $0xf0] sm:$0xff]
        %v187 = vld [vmem:[#allocation2 + $0xf8] sm:$0xff]
        %v188 = vld [vmem:[#allocation2 + $0x100] sm:$0x1]
        %v189 = vld [vmem:[%s151] sm:$0xff]
        %190 = vmatpush.msra.mxu0 %v171
        %191 = vmatpush.msra.mxu0 %v170
        %192 = vmatpush.msra.mxu0 %v169
        %193 = vmatpush.msra.mxu0 %v168
        %194 = vmatpush.msra.mxu0 %v167
        %195 = vmatpush.msra.mxu0 %v166
        %196 = vmatpush.msra.mxu0 %v165
        %197 = vmatpush.msra.mxu0 %v164
        %198 = vmatpush.msra.mxu0 %v163
        %199 = vmatpush.msra.mxu0 %v162
        %200 = vmatpush.msra.mxu0 %v161
        %201 = vmatpush.msra.mxu0 %v160
        %202 = vmatpush.msra.mxu0 %v159
        %203 = vmatpush.msra.mxu0 %v158
        %204 = vmatpush.msra.mxu0 %v157
        %205 = vmatpush.msra.mxu0 %v156
        %206 = vmatmul.f32.gmra.mxu0 %v189
        %v207 = vpop.f32.mrf.mxu0
        %v208 = vadd.f32 0.0, %v207
        %209 = vdwg.mxu0
        %v210 = vlaneseq
        %v211 = vand.u32 %v210, 127
        %vm212 = vcmp.lt.s32.totalorder %v211, 64
        %v213 = vmax.f32 %v208, 0.0
        %v214 = vsel %vm212, %v213, %v208
        %v215 = vtanh.pop %v214
        %v216 = vperm.slane %v188, 0
        %217 = vmatpush.msra.mxu0 %v187
        %218 = vmatpush.msra.mxu0 %v186
        %219 = vmatpush.msra.mxu0 %v185
        %220 = vmatpush.msra.mxu0 %v184
        %221 = vmatpush.msra.mxu0 %v183
        %222 = vmatpush.msra.mxu0 %v182
        %223 = vmatpush.msra.mxu0 %v181
        %224 = vmatpush.msra.mxu0 %v180
        %225 = vmatpush.msra.mxu0 %v179
        %226 = vmatpush.msra.mxu0 %v178
        %227 = vmatpush.msra.mxu0 %v177
        %228 = vmatpush.msra.mxu0 %v176
        %229 = vmatpush.msra.mxu0 %v175
        %230 = vmatpush.msra.mxu0 %v174
        %231 = vmatpush.msra.mxu0 %v173
        %232 = vmatpush.msra.mxu0 %v172
        %233 = vmatmul.f32.gmra.mxu0 %v215
        %v234 = vpop.f32.mrf.mxu0
        %v235 = vadd.f32 %v216, %v234
        %236 = vdwg.mxu0
        %vm237 = vcmp.lt.s32.totalorder %v211, 8
        %v238 = vsel %vm237, %v235, -1e+30
        %239 = vmax.xlane.f32.xlu0 %v238
        %v240 = vpop.xlane.xlu0 %239
        %v241 = vsub.f32 %v238, %v240
        %v242 = vmul.f32 %v241, 1.442695
        %v243 = vpow.pop %v242
        %244 = vadd.xlane.f32.xlu0 %v243
        %v245 = vpop.xlane.xlu0 %244
        %v246 = vrcp.pop %v245
        %v247 = vmul.f32 %v245, %v246
        %v248 = vsub.f32 1.0, %v247
        %v249 = vmul.f32 %v246, %v248
        %v250 = vadd.f32 %v246, %v249
        %vm251 = vweird.f32 %v245
        %vm252 = vweird.f32 %v246
        %vm253 = vmor %vm251, %vm252
        %v254 = vsel %vm253, %v246, %v250
        %v255 = vand.u32 2147483647, %v245
        %vm256 = vcmp.eq.f32.partialorder %v255, 8.507059e+37
        %v257 = vand.u32 %v245, 2147483648
        %v258 = vor.u32 1.1754944e-38, %v257
        %v259 = vsel %vm256, %v258, %v254
        %v260 = vmul.f32 %v243, %v259
        %vm261 = vcmp.eq.s32.totalorder %v211, 8
        %v262 = vsel %vm261, %v235, 0.0
        %v263 = vadd.f32 %v260, %v262
        %264 = vst [vmem:[%s155] sm:$0xff] %v263
        %p265 = scmp.lt.s32.totalorder %s14, 1
        %s266 = scalar_select %p265, %s14, 1
        %s267 = smul.addr %s266, 8
        %s268 = scalar_lea.vmem %s2, %s267
        // Predicated region
        $region33: #{actor_critic_forward.1} parent=27 // pred_check
          %p269 = pneg %p79
        $region34: #{actor_critic_forward.1} parent=27 // pred_check_branch
          %271 = sbr.rel (%p269) target = $region36
        $region35: #{actor_critic_forward.1} parent=27 // pred_region
          _
        $region36: #{actor_critic_forward.1} parent=27 // pred_fallthru
          _
      $region28: #{actor_critic_forward.1} parent=5 // pred_fallthru
        _
      %p272 = scmp.le.s32.totalorder 2, %s9
      // Predicated region
      $region37: #{actor_critic_forward.1} parent=5 // pred_check
        %p273 = pneg %p272
      $region38: #{actor_critic_forward.1} parent=5 // pred_check_branch
        %275 = sbr.rel (%p273) target = $region40
      $region39: #{actor_critic_forward.1} parent=5 // pred_region
        %s276 = ssub.s32 %s9, 2
        // Predicated region
        $region41: #{actor_critic_forward.1} parent=39 // pred_check
          %p277 = pneg %p85
        $region42: #{actor_critic_forward.1} parent=39 // pred_check_branch
          %279 = sbr.rel (%p277) target = $region44
        $region43: #{actor_critic_forward.1} parent=39 // pred_region
          %p280 = scmp.lt.s32.totalorder %s15, 1
          %s281 = scalar_select %p280, %s15, 1
          %s282 = smul.addr %s281, 8
          %s283 = scalar_lea.vmem %s2, %s282
        $region44: #{actor_critic_forward.1} parent=39 // pred_fallthru
          _
      $region40: #{actor_critic_forward.1} parent=5 // pred_fallthru
        _
    $region6: #{actor_critic_forward.1} parent=1 // loop_footer
      %s13 = sadd.s32 1, %s9
    $region7: #{actor_critic_forward.1} parent=1 // loop_footer_branch
      %8 = sbr.rel target = $region3
    $region8: #{actor_critic_forward.1} parent=1 // loop_exit
      _
    %284 = vsyncpa [#allocation3], 1
    %s285 = scalar_lea.sflag [#allocation3], 1
    %286 = vsyncpa %s285, 1

</llo_original>
